<compile_context>
chip_gen: v5e
topology: v5e:2x2
jax: 0.10.0
libtpu: 0.0.40
codegen_flags: <defaults>
</compile_context>

<pallas_src>
import jax
import jax.numpy as jnp
from jax.experimental import pallas as pl
from jax.experimental.pallas import tpu as pltpu


def _round_up(x, m):
    return ((x + m - 1) // m) * m


def _make_conv2d_kernel(kh, kw):
    """Kernel over one packed block of images.

    w_ref : SMEM (kh*kw,)   -- flat filter, scalar reads
    b_ref : SMEM (1,)       -- scalar bias
    x_ref : VMEM (rows, wp) -- packed images (sublane-stacked, lane-packed)
    y_ref : VMEM (rows, wp) -- same layout; real outputs live in the first
                               h_out rows / w_out cols of each image slot.
    """
    def kernel(w_ref, b_ref, x_ref, y_ref):
        rows, cols = x_ref.shape
        # One VMEM load; all shifts happen on the value (XLU rolls).
        x = x_ref[...]
        # Row-shifted copies: (kh-1) sublane rolls.  Wrap rows land only in
        # trimmed rows (>= h_out of the last image slot).
        x_rows = [x] + [pltpu.roll(x, shift=rows - i, axis=0)
                        for i in range(1, kh)]
        # Fold bias into the accumulator init (saves a full-tile VPU add).
        acc = jnp.full((rows, cols), b_ref[0], dtype=jnp.float32)
        for j in range(kw):
            # A_j[r, c] = sum_i X[r+i, c] * K[i, j]
            a_j = x_rows[0] * w_ref[j]
            for i in range(1, kh):
                a_j = a_j + x_rows[i] * w_ref[i * kw + j]
            # Column shift by j: lane roll ((kw-1) rolls total).  Wrap cols
            # land only in trimmed columns (>= w_out of each slot).
            if j > 0:
                a_j = pltpu.roll(a_j, shift=cols - j, axis=1)
            acc = acc + a_j
        y_ref[...] = acc
    return kernel


def _conv2d_forward_batched_impl(xb, weight, bias):
    """Batched Pallas conv: xb (B, H, W) -> (B, H-kh+1, W-kw+1), f32."""
    xb = xb.astype(jnp.float32)
    weight = weight.astype(jnp.float32)
    bias = bias.astype(jnp.float32)

    B, H, W = xb.shape
    kh, kw = weight.shape
    assert H >= kh and W >= kw, "input spatial dims must be >= kernel dims"
    h_out, w_out = H - kh + 1, W - kw + 1

    # Per-image slot geometry.
    hp_img = _round_up(H, 8)                 # sublane slot height
    if W <= 128:
        wp_block = 128
        n_lane = 128 // W                    # images packed along lanes
        wp_img = W                           # lane slot width
    else:
        wp_block = _round_up(W, 128)
        n_lane = 1
        wp_img = wp_block
    # Roll wrap-around must land only in trimmed rows/cols of each slot.
    assert hp_img >= h_out + kh - 1
    assert wp_img >= w_out + kw - 1

    # Sublane stacking: ~512-row blocks, and >= 2 grid steps when possible
    # so v7x's two TensorCores both get work.
    b_groups = pl.cdiv(B, n_lane)
    max_tb = max(1, 512 // hp_img)
    tb = min(max_tb, max(1, pl.cdiv(b_groups, 2))) if b_groups > 1 else 1
    n_blocks = pl.cdiv(b_groups, tb)
    rows = tb * hp_img
    b2 = n_blocks * tb * n_lane              # images incl. padding images

    # Pack inside the jit: (b2, hp_img, W) -> (n_blocks, tb*hp_img, n_lane*W).
    if b2 == B and hp_img == H:
        x_full = xb
    else:
        x_full = jnp.zeros((b2, hp_img, W), jnp.float32).at[:B, :H, :].set(xb)
    x_full = x_full.reshape(n_blocks, tb, n_lane, hp_img, W)
    x_full = x_full.transpose(0, 1, 3, 2, 4).reshape(n_blocks, rows, n_lane * W)
    if n_lane * W < wp_block:
        x_full = jnp.pad(x_full, ((0, 0), (0, 0), (0, wp_block - n_lane * W)))

    y_pack = pl.pallas_call(
        _make_conv2d_kernel(kh, kw),
        out_shape=jax.ShapeDtypeStruct((n_blocks, rows, wp_block), jnp.float32),
        grid=(n_blocks,),
        in_specs=[
            pl.BlockSpec(memory_space=pltpu.MemorySpace.SMEM),   # weight (kh*kw,)
            pl.BlockSpec(memory_space=pltpu.MemorySpace.SMEM),   # bias (1,)
            pl.BlockSpec((None, rows, wp_block), lambda b: (b, 0, 0)),
        ],
        out_specs=pl.BlockSpec((None, rows, wp_block), lambda b: (b, 0, 0)),
        compiler_params=pltpu.CompilerParams(
            dimension_semantics=("parallel",)),
    )(weight.reshape(-1), bias, x_full)

    # Unpack and trim the padded rows/cols of each image slot.
    y = y_pack[:, :, :n_lane * W].reshape(n_blocks, tb, hp_img, n_lane, W)
    y = y.transpose(0, 1, 3, 2, 4).reshape(b2, hp_img, W)
    return y[:B, :h_out, :w_out]


conv2d_forward_batched = jax.jit(_conv2d_forward_batched_impl)


def conv2d_forward(x, weight, bias):
    """Single-image wrapper reproducing Conv2D.forward(X) = corr2d(X, W) + b."""
    return conv2d_forward_batched(x[None], weight, bias)[0]


def _reference(x, weight, bias):
    """Pure-JAX reference implementing corr2d + bias (shifted-sum math)."""
    kh, kw = weight.shape
    h_out, w_out = x.shape[0] - kh + 1, x.shape[1] - kw + 1
    y = jnp.zeros((h_out, w_out), jnp.float32)
    for i in range(kh):
        for j in range(kw):
            y = y + x[i:i + h_out, j:j + w_out] * weight[i, j]
    return y + bias[0]


if __name__ == "__main__":
    key = jax.random.PRNGKey(0)
    k_x, k_w, k_b = jax.random.split(key, 3)

    # Module __init__: weight = torch.rand(kernel_size), bias = torch.randn(1)
    kernel_size = (3, 3)
    weight = jax.random.uniform(k_w, kernel_size, dtype=jnp.float32)   # ~torch.rand
    bias = jax.random.normal(k_b, (1,), dtype=jnp.float32)             # ~torch.randn

    # Small batch of 2-D feature maps (corr2d itself takes a 2-D tensor;
    # batching amortizes launch / per-grid-step overhead and fills the lanes).
    B, H, W = 16, 16, 16
    xb = jax.random.normal(k_x, (B, H, W), dtype=jnp.float32)

    # Batched kernel call (8 images lane-packed per 128-lane group, 2 blocks).
    yb = jax.block_until_ready(conv2d_forward_batched(xb, weight, bias))
    assert yb.shape == (B, H - 3 + 1, W - 3 + 1)
    for b in range(B):
        y_ref = _reference(xb[b], weight, bias)
        assert jnp.allclose(yb[b], y_ref, atol=1e-5, rtol=1e-5)

    # Single-image path (exact module forward semantics).
    y0 = jax.block_until_ready(conv2d_forward(xb[0], weight, bias))
    assert y0.shape == (14, 14)
    assert jnp.allclose(y0, _reference(xb[0], weight, bias), atol=1e-5, rtol=1e-5)

    print("KERNEL_OK")
</pallas_src>

<mosaic_0001>
module attributes {stable_mosaic.version = 11 : i64} {
  func.func @kernel(%arg0: i32, %arg1: memref<9xf32, #tpu.memory_space<smem>>, %arg2: memref<1xf32, #tpu.memory_space<smem>>, %arg3: memref<1x16x128xf32, #tpu.memory_space<vmem>>, %arg4: memref<1x16x128xf32, #tpu.memory_space<vmem>>) attributes {dimension_semantics = [#tpu.dimension_semantics<parallel>], iteration_bounds = array<i64: 2>, scalar_prefetch = 0 : i64, scratch_operands = 0 : i64, tpu.core_type = #tpu.core_type<tc>, window_params = [{transform_indices = @transform_0, window_bounds = array<i64: 9>}, {transform_indices = @transform_1, window_bounds = array<i64: 1>}, {transform_indices = @transform_2, window_bounds = array<i64: 1, 16, 128>}, {transform_indices = @transform_3, window_bounds = array<i64: 1, 16, 128>}]} {
    %c0 = arith.constant 0 : index
    %c0_0 = arith.constant 0 : index
    %c0_1 = arith.constant 0 : index
    %0 = vector.load %arg3[%c0, %c0_0, %c0_1] : memref<1x16x128xf32, #tpu.memory_space<vmem>>, vector<1x16x128xf32>
    %1 = vector.shape_cast %0 : vector<1x16x128xf32> to vector<16x128xf32>
    %c15_i32 = arith.constant 15 : i32
    %2 = tpu.dynamic_rotate %1 by %c15_i32 dim 0 : vector<16x128xf32>, i32 -> vector<16x128xf32>
    %c14_i32 = arith.constant 14 : i32
    %3 = tpu.dynamic_rotate %1 by %c14_i32 dim 0 : vector<16x128xf32>, i32 -> vector<16x128xf32>
    %c0_2 = arith.constant 0 : index
    %4 = memref.load %arg2[%c0_2] : memref<1xf32, #tpu.memory_space<smem>>
    %5 = vector.broadcast %4 : f32 to vector<16x128xf32>
    %c0_3 = arith.constant 0 : index
    %6 = memref.load %arg1[%c0_3] : memref<9xf32, #tpu.memory_space<smem>>
    %7 = vector.broadcast %6 : f32 to vector<16x128xf32>
    %8 = arith.mulf %1, %7 : vector<16x128xf32>
    %c3 = arith.constant 3 : index
    %9 = memref.load %arg1[%c3] : memref<9xf32, #tpu.memory_space<smem>>
    %10 = vector.broadcast %9 : f32 to vector<16x128xf32>
    %11 = arith.mulf %2, %10 : vector<16x128xf32>
    %12 = arith.addf %8, %11 : vector<16x128xf32>
    %c6 = arith.constant 6 : index
    %13 = memref.load %arg1[%c6] : memref<9xf32, #tpu.memory_space<smem>>
    %14 = vector.broadcast %13 : f32 to vector<16x128xf32>
    %15 = arith.mulf %3, %14 : vector<16x128xf32>
    %16 = arith.addf %12, %15 : vector<16x128xf32>
    %17 = arith.addf %5, %16 : vector<16x128xf32>
    %c1 = arith.constant 1 : index
    %18 = memref.load %arg1[%c1] : memref<9xf32, #tpu.memory_space<smem>>
    %19 = vector.broadcast %18 : f32 to vector<16x128xf32>
    %20 = arith.mulf %1, %19 : vector<16x128xf32>
    %c4 = arith.constant 4 : index
    %21 = memref.load %arg1[%c4] : memref<9xf32, #tpu.memory_space<smem>>
    %22 = vector.broadcast %21 : f32 to vector<16x128xf32>
    %23 = arith.mulf %2, %22 : vector<16x128xf32>
    %24 = arith.addf %20, %23 : vector<16x128xf32>
    %c7 = arith.constant 7 : index
    %25 = memref.load %arg1[%c7] : memref<9xf32, #tpu.memory_space<smem>>
    %26 = vector.broadcast %25 : f32 to vector<16x128xf32>
    %27 = arith.mulf %3, %26 : vector<16x128xf32>
    %28 = arith.addf %24, %27 : vector<16x128xf32>
    %c127_i32 = arith.constant 127 : i32
    %29 = tpu.dynamic_rotate %28 by %c127_i32 dim 1 : vector<16x128xf32>, i32 -> vector<16x128xf32>
    %30 = arith.addf %17, %29 : vector<16x128xf32>
    %c2 = arith.constant 2 : index
    %31 = memref.load %arg1[%c2] : memref<9xf32, #tpu.memory_space<smem>>
    %32 = vector.broadcast %31 : f32 to vector<16x128xf32>
    %33 = arith.mulf %1, %32 : vector<16x128xf32>
    %c5 = arith.constant 5 : index
    %34 = memref.load %arg1[%c5] : memref<9xf32, #tpu.memory_space<smem>>
    %35 = vector.broadcast %34 : f32 to vector<16x128xf32>
    %36 = arith.mulf %2, %35 : vector<16x128xf32>
    %37 = arith.addf %33, %36 : vector<16x128xf32>
    %c8 = arith.constant 8 : index
    %38 = memref.load %arg1[%c8] : memref<9xf32, #tpu.memory_space<smem>>
    %39 = vector.broadcast %38 : f32 to vector<16x128xf32>
    %40 = arith.mulf %3, %39 : vector<16x128xf32>
    %41 = arith.addf %37, %40 : vector<16x128xf32>
    %c126_i32 = arith.constant 126 : i32
    %42 = tpu.dynamic_rotate %41 by %c126_i32 dim 1 : vector<16x128xf32>, i32 -> vector<16x128xf32>
    %43 = arith.addf %30, %42 : vector<16x128xf32>
    %c0_4 = arith.constant 0 : index
    %c0_5 = arith.constant 0 : index
    %c0_6 = arith.constant 0 : index
    %44 = vector.load %arg4[%c0_4, %c0_5, %c0_6] : memref<1x16x128xf32, #tpu.memory_space<vmem>>, vector<1x16x128xf32>
    %45 = vector.shape_cast %44 : vector<1x16x128xf32> to vector<16x128xf32>
    %46 = vector.shape_cast %43 : vector<16x128xf32> to vector<1x16x128xf32>
    tpu.vector_store %arg4[%c0_4, %c0_5, %c0_6], %46 {strides = array<i32>} : memref<1x16x128xf32, #tpu.memory_space<vmem>>, vector<1x16x128xf32>,
    return
  }
  func.func @transform_0(%arg0: i32) -> i32 {
    %c0_i32 = arith.constant 0 : i32
    %c0_i32_0 = arith.constant 0 : i32
    return %c0_i32 : i32
  }
  func.func @transform_1(%arg0: i32) -> i32 {
    %c0_i32 = arith.constant 0 : i32
    %c0_i32_0 = arith.constant 0 : i32
    return %c0_i32 : i32
  }
  func.func @transform_2(%arg0: i32) -> (i32, i32, i32) {
    %c0_i32 = arith.constant 0 : i32
    %c0_i32_0 = arith.constant 0 : i32
    %c0_i32_1 = arith.constant 0 : i32
    return %arg0, %c0_i32, %c0_i32_0 : i32, i32, i32
  }
  func.func @transform_3(%arg0: i32) -> (i32, i32, i32) {
    %c0_i32 = arith.constant 0 : i32
    %c0_i32_0 = arith.constant 0 : i32
    %c0_i32_1 = arith.constant 0 : i32
    return %arg0, %c0_i32, %c0_i32_0 : i32, i32, i32
  }
}

</mosaic_0001>

<llo_original>
// kernel: _conv2d_forward_batched_impl.1
$region0: #{_conv2d_forward_batched_impl.1}
  #allocation0 [shape = 'u32[]', space=smem, size = 0x4, offset = 0x4, fixed_abs, tag = 'smem constant byte address 0x4 - core index']
  #allocation1 [shape = 'u32[72,128]{1,0:T(1,128)}', space=vmem, size = 0x9000, scoped, tag = 'internal scratch']
  #allocation2 [shape = 'f32[1]{0:T(128)S(6)}', space=smem, size = 0x200, scoped, tag = 'scoped memory for _conv2d_forward_batched_impl.1']
  %s0 = inlined_call_operand.vmem [shape: f32[9], index: 0, kind: input, shape index: {}]
  %s1 = inlined_call_operand.<no memory space> [shape: f32[1], index: 1, kind: input, shape index: {}]
  %s2 = inlined_call_operand.vmem [shape: f32[2,16,128], index: 2, kind: input, shape index: {}]
  %s3 = inlined_call_operand.vmem [shape: f32[2,16,128], index: 3, kind: output, shape index: {}]
  %s4 = sld [smem:[#allocation0]]
  $region49: #{_conv2d_forward_batched_impl.1} parent=0
    _
  %s6 = ssub.s32 1, %s4
  %s7 = scalar_select 0, %s6, %s4
  %8 = sst [smem:[#allocation2]] %s1
  $region1: #{_conv2d_forward_batched_impl.1} parent=0
    #allocation3 [shape = 'u8[512]{0}', space=smem, size = 0x200, scoped, tag = 'input window, operand 0, single buffered']
    #allocation4 [shape = 's32[2]{0}', space=sflag, size = 0x8, scoped, tag = 'scoped memory for _conv2d_forward_batched_impl.1']
    %9 = vsyncpa [#allocation4], 0
    loop: start=0, step=1, limit=4
    $region2: #{_conv2d_forward_batched_impl.1} parent=1 // loop_pre_header
      _
    $region3: #{_conv2d_forward_batched_impl.1} parent=1 // loop_header
      %s11 = sphi 0, %s15
      %p12 = scmp.ge.s32.totalorder %s11, 4
      %s19 = sphi 0, %s19
      %s21 = sphi 0, %s19
      %s22 = sphi 0, %s21
      %s36 = sphi 0, %s22
      %s40 = sphi 0, %s40
      %s42 = sphi 0, %s40
      %s43 = sphi 0, %s42
      %s57 = sphi 0, %s43
      %s63 = sphi 0, %s65
      %s66 = sphi 0, %s63
      %s67 = sphi 0, %s66
      %s83 = sphi 0, %s67
      %s89 = sphi 0, %s91
      %s92 = sphi 0, %s89
      %s93 = sphi 0, %s92
      %s109 = sphi 0, %s93
    $region4: #{_conv2d_forward_batched_impl.1} parent=1 // loop_header_branch
      %14 = sbr.rel (%p12) target = $region8
    $region5: #{_conv2d_forward_batched_impl.1} parent=1 // loop_body
      %s16 = ssub.s32 %s11, 1
      %s17 = ssub.s32 %s11, 2
      %s18 = sadd.s32 %s11, 1
      %s20 = sadd.s32 %s19, 1
      %p23 = scmp.eq.s32.totalorder %s11, 1
      %p24 = scmp.ne.s32.totalorder %s19, %s21
      %p25 = scmp.eq.s32.totalorder %s11, 0
      %p26 = por %p24, %p25
      %p27 = scmp.ne.s32.totalorder %s19, %s21
      %p28 = scmp.eq.s32.totalorder %s16, 1
      %p29 = por %p27, %p28
      %p30 = scmp.ne.s32.totalorder %s21, %s22
      %p31 = scmp.eq.s32.totalorder %s16, 0
      %p32 = por %p30, %p31
      %p33 = scmp.ne.s32.totalorder %s21, %s22
      %p34 = scmp.eq.s32.totalorder %s17, 1
      %p35 = por %p33, %p34
      %p37 = scmp.ne.s32.totalorder %s22, %s36
      %p38 = scmp.eq.s32.totalorder %s17, 0
      %p39 = por %p37, %p38
      %s41 = sadd.s32 %s40, 1
      %p44 = scmp.eq.s32.totalorder %s11, 1
      %p45 = scmp.ne.s32.totalorder %s40, %s42
      %p46 = scmp.eq.s32.totalorder %s11, 0
      %p47 = por %p45, %p46
      %p48 = scmp.ne.s32.totalorder %s40, %s42
      %p49 = scmp.eq.s32.totalorder %s16, 1
      %p50 = por %p48, %p49
      %p51 = scmp.ne.s32.totalorder %s42, %s43
      %p52 = scmp.eq.s32.totalorder %s16, 0
      %p53 = por %p51, %p52
      %p54 = scmp.ne.s32.totalorder %s42, %s43
      %p55 = scmp.eq.s32.totalorder %s17, 1
      %p56 = por %p54, %p55
      %p58 = scmp.ne.s32.totalorder %s43, %s57
      %p59 = scmp.eq.s32.totalorder %s17, 0
      %p60 = por %p58, %p59
      %s61 = ssub.s32 %s11, %s18
      %p62 = scmp.eq.s32.totalorder %s61, 0
      %s64 = sadd.s32 %s63, 1
      %s65 = scalar_select %p62, %s63, %s64
      %p68 = pneg %p62
      %p69 = scmp.eq.s32.totalorder %s11, 1
      %p70 = por %p68, %p69
      %p71 = scmp.ne.s32.totalorder %s63, %s66
      %p72 = scmp.eq.s32.totalorder %s11, 0
      %p73 = por %p71, %p72
      %p74 = scmp.ne.s32.totalorder %s63, %s66
      %p75 = scmp.eq.s32.totalorder %s16, 1
      %p76 = por %p74, %p75
      %p77 = scmp.ne.s32.totalorder %s66, %s67
      %p78 = scmp.eq.s32.totalorder %s16, 0
      %p79 = por %p77, %p78
      %p80 = scmp.ne.s32.totalorder %s66, %s67
      %p81 = scmp.eq.s32.totalorder %s17, 1
      %p82 = por %p80, %p81
      %p84 = scmp.ne.s32.totalorder %s67, %s83
      %p85 = scmp.eq.s32.totalorder %s17, 0
      %p86 = por %p84, %p85
      %s87 = ssub.s32 %s11, %s18
      %p88 = scmp.eq.s32.totalorder %s87, 0
      %s90 = sadd.s32 %s89, 1
      %s91 = scalar_select %p88, %s89, %s90
      %p94 = pneg %p88
      %p95 = scmp.eq.s32.totalorder %s11, 1
      %p96 = por %p94, %p95
      %p97 = scmp.ne.s32.totalorder %s89, %s92
      %p98 = scmp.eq.s32.totalorder %s11, 0
      %p99 = por %p97, %p98
      %p100 = scmp.ne.s32.totalorder %s89, %s92
      %p101 = scmp.eq.s32.totalorder %s16, 1
      %p102 = por %p100, %p101
      %p103 = scmp.ne.s32.totalorder %s92, %s93
      %p104 = scmp.eq.s32.totalorder %s16, 0
      %p105 = por %p103, %p104
      %p106 = scmp.ne.s32.totalorder %s92, %s93
      %p107 = scmp.eq.s32.totalorder %s17, 1
      %p108 = por %p106, %p107
      %p110 = scmp.ne.s32.totalorder %s93, %s109
      %p111 = scmp.eq.s32.totalorder %s17, 0
      %p112 = por %p110, %p111
      %p113 = scmp.le.s32.totalorder 1, %s11
      %p114 = scmp.lt.s32.totalorder %s11, 3
      %p115 = pnand %p113, %p114
      %p116 = pneg %p115
      // Predicated region
      $region9: #{_conv2d_forward_batched_impl.1} parent=5 // pred_check
        _
      $region10: #{_conv2d_forward_batched_impl.1} parent=5 // pred_check_branch
        %118 = sbr.rel (%p115) target = $region12
      $region11: #{_conv2d_forward_batched_impl.1} parent=5 // pred_region
        %s119 = ssub.s32 %s11, 1
        // Predicated region
        $region13: #{_conv2d_forward_batched_impl.1} parent=11 // pred_check
          %p120 = pneg %p32
        $region14: #{_conv2d_forward_batched_impl.1} parent=11 // pred_check_branch
          %122 = sbr.rel (%p120) target = $region16
        $region15: #{_conv2d_forward_batched_impl.1} parent=11 // pred_region
          %124 = vsyncadd [#allocation4], 0
          %s126 = sshll.u32 %s0, 4
          %s127 = int_to_ptr.vmem [resolvable:$true] %s126
          %129 = dma.vmem_to_smem %s127, 16, [#allocation3], [#allocation4]
        $region16: #{_conv2d_forward_batched_impl.1} parent=11 // pred_fallthru
          _
        // Predicated region
        $region17: #{_conv2d_forward_batched_impl.1} parent=11 // pred_check
          %p130 = pneg %p53
        $region18: #{_conv2d_forward_batched_impl.1} parent=11 // pred_check_branch
          %132 = sbr.rel (%p130) target = $region20
        $region19: #{_conv2d_forward_batched_impl.1} parent=11 // pred_region
          _
        $region20: #{_conv2d_forward_batched_impl.1} parent=11 // pred_fallthru
          _
      $region12: #{_conv2d_forward_batched_impl.1} parent=5 // pred_fallthru
        _
      %p133 = scmp.lt.s32.totalorder %s11, 2
      // Predicated region
      $region21: #{_conv2d_forward_batched_impl.1} parent=5 // pred_check
        %p134 = pneg %p133
      $region22: #{_conv2d_forward_batched_impl.1} parent=5 // pred_check_branch
        %136 = sbr.rel (%p134) target = $region24
      $region23: #{_conv2d_forward_batched_impl.1} parent=5 // pred_region
        // Predicated region
        $region25: #{_conv2d_forward_batched_impl.1} parent=23 // pred_check
          %p137 = pneg %p73
        $region26: #{_conv2d_forward_batched_impl.1} parent=23 // pred_check_branch
          %139 = sbr.rel (%p137) target = $region28
        $region27: #{_conv2d_forward_batched_impl.1} parent=23 // pred_region
          %p140 = scmp.lt.s32.totalorder %s11, 1
          %s141 = scalar_select %p140, %s11, 1
          %s142 = smul.addr %s141, 2
          %s143 = smul.addr %s142, 8
          %s144 = scalar_lea.vmem %s2, %s143
        $region28: #{_conv2d_forward_batched_impl.1} parent=23 // pred_fallthru
          _
      $region24: #{_conv2d_forward_batched_impl.1} parent=5 // pred_fallthru
        _
      %p145 = scmp.le.s32.totalorder 1, %s11
      %p146 = scmp.lt.s32.totalorder %s11, 3
      %p147 = pnand %p145, %p146
      %p148 = pneg %p147
      // Predicated region
      $region29: #{_conv2d_forward_batched_impl.1} parent=5 // pred_check
        _
      $region30: #{_conv2d_forward_batched_impl.1} parent=5 // pred_check_branch
        %150 = sbr.rel (%p147) target = $region32
      $region31: #{_conv2d_forward_batched_impl.1} parent=5 // pred_region
        %s151 = ssub.s32 %s11, 1
        // Predicated region
        $region33: #{_conv2d_forward_batched_impl.1} parent=31 // pred_check
          %p152 = pneg %p32
        $region34: #{_conv2d_forward_batched_impl.1} parent=31 // pred_check_branch
          %154 = sbr.rel (%p152) target = $region36
        $region35: #{_conv2d_forward_batched_impl.1} parent=31 // pred_region
          %156 = dma.done [#allocation4], 16
        $region36: #{_conv2d_forward_batched_impl.1} parent=31 // pred_fallthru
          _
        %157 = sfence
        %p158 = pneg %p32
        %p159 = pneg %p29
        %p160 = pneg %p53
        %p161 = pneg %p50
        %p162 = scmp.lt.s32.totalorder %s16, 1
        %s163 = scalar_select %p162, %s16, 1
        %s164 = smul.addr %s163, 2
        %s165 = smul.addr %s164, 8
        %s166 = scalar_lea.vmem %s2, %s165
        %p167 = pneg %p79
        %p168 = pneg %p76
        %p169 = pneg %p105
        %p170 = pneg %p102
        %p171 = scmp.lt.s32.totalorder %s16, 1
        %s172 = scalar_select %p171, %s16, 1
        %s173 = smul.addr %s172, 2
        %s174 = smul.addr %s173, 8
        %s175 = scalar_lea.vmem %s3, %s174
        %p176 = scmp.lt.s32.totalorder %s16, 1
        %s177 = scalar_select %p176, %s16, 1
        %s178 = smul.addr %s177, 2
        %s179 = smul.addr %s178, 8
        %s180 = scalar_lea.vmem %s2, %s179
        %p181 = scmp.lt.s32.totalorder %s16, 1
        %s182 = scalar_select %p181, %s16, 1
        %s183 = smul.addr %s182, 2
        %s184 = smul.addr %s183, 8
        %s185 = scalar_lea.vmem %s3, %s184
        %v186 = vld [vmem:[%s180] sm:$0xff]
        %v187 = vld [vmem:[%s180 + $0x8] sm:$0xff]
        %v188 = vrot.slane %v186, 1
        %v189 = vrot.slane %v187, 1
        %v190 = vlaneseq
        %v191 = vshrl.u32 %v190, 7
        %vm192 = vcmp.lt.s32.totalorder %v191, 7
        %v193 = vsel %vm192, %v188, %v189
        %v194 = vsel %vm192, %v189, %v188
        %v195 = vrot.slane %v186, 2
        %v196 = vrot.slane %v187, 2
        %vm197 = vcmp.lt.s32.totalorder %v191, 6
        %v198 = vsel %vm197, %v195, %v196
        %v199 = vsel %vm197, %v196, %v195
        %s200 = sld [smem:[#allocation2]]
        %v201 = vstv %s200
        %s202 = sld [smem:[#allocation3]]
        %v203 = vstv %s202
        %v204 = vmul.f32 %v186, %v203
        %v205 = vmul.f32 %v187, %v203
        %s206 = sld [smem:[#allocation3 + $0x3]]
        %v207 = vstv %s206
        %v208 = vmul.f32 %v193, %v207
        %v209 = vmul.f32 %v194, %v207
        %v210 = vadd.f32 %v204, %v208
        %v211 = vadd.f32 %v205, %v209
        %s212 = sld [smem:[#allocation3 + $0x6]]
        %v213 = vstv %s212
        %v214 = vmul.f32 %v198, %v213
        %v215 = vmul.f32 %v199, %v213
        %v216 = vadd.f32 %v210, %v214
        %v217 = vadd.f32 %v211, %v215
        %v218 = vadd.f32 %v201, %v216
        %v219 = vadd.f32 %v201, %v217
        %s220 = sld [smem:[#allocation3 + $0x1]]
        %v221 = vstv %s220
        %v222 = vmul.f32 %v186, %v221
        %v223 = vmul.f32 %v187, %v221
        %s224 = sld [smem:[#allocation3 + $0x4]]
        %v225 = vstv %s224
        %v226 = vmul.f32 %v193, %v225
        %v227 = vmul.f32 %v194, %v225
        %v228 = vadd.f32 %v222, %v226
        %v229 = vadd.f32 %v223, %v227
        %s230 = sld [smem:[#allocation3 + $0x7]]
        %v231 = vstv %s230
        %v232 = vmul.f32 %v198, %v231
        %v233 = vmul.f32 %v199, %v231
        %v234 = vadd.f32 %v228, %v232
        %v235 = vadd.f32 %v229, %v233
        %236 = vrot.lane.b32.xlu0 %v234, 127
        %v237 = vpop.permute.xlu0 %236
        %238 = vrot.lane.b32.xlu0 %v235, 127
        %v239 = vpop.permute.xlu0 %238
        %v240 = vadd.f32 %v218, %v237
        %v241 = vadd.f32 %v219, %v239
        %s242 = sld [smem:[#allocation3 + $0x2]]
        %v243 = vstv %s242
        %v244 = vmul.f32 %v186, %v243
        %v245 = vmul.f32 %v187, %v243
        %s246 = sld [smem:[#allocation3 + $0x5]]
        %v247 = vstv %s246
        %v248 = vmul.f32 %v193, %v247
        %v249 = vmul.f32 %v194, %v247
        %v250 = vadd.f32 %v244, %v248
        %v251 = vadd.f32 %v245, %v249
        %s252 = sld [smem:[#allocation3 + $0x8]]
        %v253 = vstv %s252
        %v254 = vmul.f32 %v198, %v253
        %v255 = vmul.f32 %v199, %v253
        %v256 = vadd.f32 %v250, %v254
        %v257 = vadd.f32 %v251, %v255
        %258 = vrot.lane.b32.xlu0 %v256, 126
        %v259 = vpop.permute.xlu0 %258
        %260 = vrot.lane.b32.xlu0 %v257, 126
        %v261 = vpop.permute.xlu0 %260
        %v262 = vadd.f32 %v240, %v259
        %v263 = vadd.f32 %v241, %v261
        %264 = vst [vmem:[%s185] sm:$0xff] %v262
        %265 = vst [vmem:[%s185 + $0x8] sm:$0xff] %v263
        %p266 = scmp.lt.s32.totalorder %s16, 1
        %s267 = scalar_select %p266, %s16, 1
        %s268 = smul.addr %s267, 2
        %s269 = smul.addr %s268, 8
        %s270 = scalar_lea.vmem %s3, %s269
        // Predicated region
        $region37: #{_conv2d_forward_batched_impl.1} parent=31 // pred_check
          %p271 = pneg %p102
        $region38: #{_conv2d_forward_batched_impl.1} parent=31 // pred_check_branch
          %273 = sbr.rel (%p271) target = $region40
        $region39: #{_conv2d_forward_batched_impl.1} parent=31 // pred_region
          _
        $region40: #{_conv2d_forward_batched_impl.1} parent=31 // pred_fallthru
          _
      $region32: #{_conv2d_forward_batched_impl.1} parent=5 // pred_fallthru
        _
      %p274 = scmp.le.s32.totalorder 2, %s11
      // Predicated region
      $region41: #{_conv2d_forward_batched_impl.1} parent=5 // pred_check
        %p275 = pneg %p274
      $region42: #{_conv2d_forward_batched_impl.1} parent=5 // pred_check_branch
        %277 = sbr.rel (%p275) target = $region44
      $region43: #{_conv2d_forward_batched_impl.1} parent=5 // pred_region
        %s278 = ssub.s32 %s11, 2
        // Predicated region
        $region45: #{_conv2d_forward_batched_impl.1} parent=43 // pred_check
          %p279 = pneg %p108
        $region46: #{_conv2d_forward_batched_impl.1} parent=43 // pred_check_branch
          %281 = sbr.rel (%p279) target = $region48
        $region47: #{_conv2d_forward_batched_impl.1} parent=43 // pred_region
          %p282 = scmp.lt.s32.totalorder %s17, 1
          %s283 = scalar_select %p282, %s17, 1
          %s284 = smul.addr %s283, 2
          %s285 = smul.addr %s284, 8
          %s286 = scalar_lea.vmem %s3, %s285
        $region48: #{_conv2d_forward_batched_impl.1} parent=43 // pred_fallthru
          _
      $region44: #{_conv2d_forward_batched_impl.1} parent=5 // pred_fallthru
        _
    $region6: #{_conv2d_forward_batched_impl.1} parent=1 // loop_footer
      %s15 = sadd.s32 1, %s11
    $region7: #{_conv2d_forward_batched_impl.1} parent=1 // loop_footer_branch
      %10 = sbr.rel target = $region3
    $region8: #{_conv2d_forward_batched_impl.1} parent=1 // loop_exit
      _
    %287 = vsyncpa [#allocation4], 1
    %s288 = scalar_lea.sflag [#allocation4], 1
    %289 = vsyncpa %s288, 1

</llo_original>
